<compile_context>
chip_gen: v6e
topology: v6e:2x2x1
jax: 0.10.0
libtpu: 0.0.40
codegen_flags: <defaults>
</compile_context>

<pallas_src>
import functools

import jax
import jax.numpy as jnp
from jax import lax
from jax.experimental import pallas as pl
from jax.experimental.pallas import tpu as pltpu

LANES = 128
DEFAULT_BLOCK_ROWS = 4096  # 4096 x 128 f32 = 2 MiB per input block


def _wloss_partial_kernel(real_ref, fake_ref, out_r_ref, out_f_ref, *,
                          block_rows, nsteps, rows_valid, needs_mask):
    c = pl.program_id(0)   # core-split axis ("parallel")
    j = pl.program_id(1)   # reduction axis ("arbitrary")

    # Initialize the resident per-core accumulator blocks on the first step.
    @pl.when(j == 0)
    def _():
        out_r_ref[...] = jnp.zeros_like(out_r_ref)
        out_f_ref[...] = jnp.zeros_like(out_f_ref)

    # Upcast in-kernel; inputs stay in native dtype in HBM.
    rt = real_ref[...].astype(jnp.float32)
    ft = fake_ref[...].astype(jnp.float32)

    if needs_mask:
        # Zero out rows that fall beyond the true row count (partial last
        # block and/or duplicated clamped blocks on the second core).
        blk = c * nsteps + j
        row_ids = blk * block_rows + lax.broadcasted_iota(
            jnp.int32, (block_rows, LANES), 0)
        valid = row_ids < rows_valid
        rt = jnp.where(valid, rt, 0.0)
        ft = jnp.where(valid, ft, 0.0)

    if block_rows % 8 == 0:
        # Elementwise (VPU) accumulation into a vreg-shaped (1, 8, 128) partial.
        out_r_ref[...] += rt.reshape(1, -1, 8, LANES).sum(axis=1)
        out_f_ref[...] += ft.reshape(1, -1, 8, LANES).sum(axis=1)
    else:
        # Tiny single-block case where rows is not a multiple of 8.
        out_r_ref[0:1, 0:1, :] += jnp.sum(rt, axis=0, keepdims=True).reshape(
            1, 1, LANES)
        out_f_ref[0:1, 0:1, :] += jnp.sum(ft, axis=0, keepdims=True).reshape(
            1, 1, LANES)


def _to_lane_slab(x):
    """Flatten to (rows, 128) in native dtype; pad only to the next 128-lane
    boundary (zeros are neutral for the sum; true count is returned)."""
    flat = x.reshape(-1)
    n = flat.shape[0]
    pad = (-n) % LANES
    if pad:
        flat = jnp.pad(flat, (0, pad))
    return flat.reshape(-1, LANES), n


def wasserstein_critic_loss(predict_real, predict_fake, *, block_rows=None):
    real2d, n_real = _to_lane_slab(predict_real)
    fake2d, n_fake = _to_lane_slab(predict_fake)
    if real2d.shape != fake2d.shape:
        raise ValueError(
            "predict_real and predict_fake must flatten to the same lane slab "
            f"({real2d.shape} vs {fake2d.shape})")

    rows = real2d.shape[0]

    if block_rows is None:
        block_rows = DEFAULT_BLOCK_ROWS
    if rows <= block_rows:
        block_rows = rows                       # full-extent block (always legal)
    else:
        block_rows = max((block_rows // 8) * 8, 8)  # (8,128)-aligned block

    total_blocks = pl.cdiv(rows, block_rows)
    num_cores = 2 if total_blocks >= 2 else 1   # v7x: split rows across 2 TCs
    nsteps = pl.cdiv(total_blocks, num_cores)
    padded_blocks = num_cores * nsteps
    needs_mask = (padded_blocks * block_rows != rows)
    needs_clamp = padded_blocks > total_blocks

    if needs_clamp:
        # Keep every DMA in bounds; the duplicated block is zeroed by the mask.
        def in_index(c, j):
            return (jnp.minimum(c * nsteps + j, total_blocks - 1), 0)
    else:
        def in_index(c, j):
            return (c * nsteps + j, 0)

    kernel = functools.partial(
        _wloss_partial_kernel,
        block_rows=block_rows, nsteps=nsteps,
        rows_valid=rows, needs_mask=needs_mask)

    out_shape = jax.ShapeDtypeStruct((num_cores, 8, LANES), jnp.float32)
    out_spec = pl.BlockSpec((1, 8, LANES), lambda c, j: (c, 0, 0))

    part_real, part_fake = pl.pallas_call(
        kernel,
        out_shape=(out_shape, out_shape),
        grid_spec=pltpu.PrefetchScalarGridSpec(
            num_scalar_prefetch=0,
            grid=(num_cores, nsteps),
            in_specs=[
                pl.BlockSpec((block_rows, LANES), in_index),
                pl.BlockSpec((block_rows, LANES), in_index),
            ],
            out_specs=[out_spec, out_spec],
        ),
        compiler_params=pltpu.CompilerParams(
            dimension_semantics=("parallel", "arbitrary")),
    )(real2d, fake2d)

    # One-time tiny epilogue: cross-lane reduce the (num_cores, 8, 128) partials
    # and form -(mean_real - mean_fake) = mean_fake - mean_real.
    mean_real = jnp.sum(part_real) / n_real
    mean_fake = jnp.sum(part_fake) / n_fake
    return mean_fake - mean_real


if __name__ == "__main__":
    key = jax.random.PRNGKey(0)
    k1, k2, k3, k4 = jax.random.split(key, 4)

    # Critic scores for real and fake images (small synthetic NCHW-like shapes).
    predict_real = jax.random.normal(k1, (2, 4, 16, 16), dtype=jnp.float32)
    predict_fake = jax.random.normal(k2, (2, 4, 16, 16), dtype=jnp.float32)

    loss = wasserstein_critic_loss(predict_real, predict_fake)
    jax.block_until_ready(loss)
    ref = -(jnp.mean(predict_real) - jnp.mean(predict_fake))
    assert jnp.allclose(loss, ref, atol=1e-6, rtol=1e-6), (loss, ref)

    # Second check: ragged element count + multi-block grid + 2-core split,
    # exercising the mask / clamped-index paths at a tiny size.
    pr2 = jax.random.normal(k3, (2, 3, 25, 17), dtype=jnp.float32)
    pf2 = jax.random.normal(k4, (2, 3, 25, 17), dtype=jnp.float32)
    loss2 = wasserstein_critic_loss(pr2, pf2, block_rows=8)
    jax.block_until_ready(loss2)
    ref2 = -(jnp.mean(pr2) - jnp.mean(pf2))
    assert jnp.allclose(loss2, ref2, atol=1e-6, rtol=1e-6), (loss2, ref2)

    print("KERNEL_OK")
</pallas_src>

<mosaic_0001>
module attributes {stable_mosaic.version = 11 : i64} {
  func.func @_wloss_partial_kernel(%arg0: i32, %arg1: i32, %arg2: memref<16x128xf32, #tpu.memory_space<vmem>>, %arg3: memref<16x128xf32, #tpu.memory_space<vmem>>, %arg4: memref<1x8x128xf32, #tpu.memory_space<vmem>>, %arg5: memref<1x8x128xf32, #tpu.memory_space<vmem>>) attributes {dimension_semantics = [#tpu.dimension_semantics<parallel>, #tpu.dimension_semantics<arbitrary>], iteration_bounds = array<i64: 1, 1>, scalar_prefetch = 0 : i64, scratch_operands = 0 : i64, tpu.core_type = #tpu.core_type<tc>, window_params = [{transform_indices = @transform_0, window_bounds = array<i64: 16, 128>}, {transform_indices = @transform_1, window_bounds = array<i64: 16, 128>}, {transform_indices = @transform_2, window_bounds = array<i64: 1, 8, 128>}, {transform_indices = @transform_3, window_bounds = array<i64: 1, 8, 128>}]} {
    %c0_i32 = arith.constant 0 : i32
    %0 = arith.cmpi eq, %arg1, %c0_i32 : i32
    %1 = arith.extui %0 : i1 to i32
    %c0_i32_0 = arith.constant 0 : i32
    %2 = arith.cmpi ne, %1, %c0_i32_0 : i32
    scf.if %2 {
      %cst_17 = arith.constant 0.000000e+00 : f32
      %15 = vector.broadcast %cst_17 : f32 to vector<1x8x128xf32>
      %c0_18 = arith.constant 0 : index
      %c0_19 = arith.constant 0 : index
      %c0_20 = arith.constant 0 : index
      %16 = vector.load %arg4[%c0_18, %c0_19, %c0_20] : memref<1x8x128xf32, #tpu.memory_space<vmem>>, vector<1x8x128xf32>
      tpu.vector_store %arg4[%c0_18, %c0_19, %c0_20], %15 {strides = array<i32>} : memref<1x8x128xf32, #tpu.memory_space<vmem>>, vector<1x8x128xf32>,
      %cst_21 = arith.constant 0.000000e+00 : f32
      %17 = vector.broadcast %cst_21 : f32 to vector<1x8x128xf32>
      %c0_22 = arith.constant 0 : index
      %c0_23 = arith.constant 0 : index
      %c0_24 = arith.constant 0 : index
      %18 = vector.load %arg5[%c0_22, %c0_23, %c0_24] : memref<1x8x128xf32, #tpu.memory_space<vmem>>, vector<1x8x128xf32>
      tpu.vector_store %arg5[%c0_22, %c0_23, %c0_24], %17 {strides = array<i32>} : memref<1x8x128xf32, #tpu.memory_space<vmem>>, vector<1x8x128xf32>,
    } else {
    }
    %c0 = arith.constant 0 : index
    %c0_1 = arith.constant 0 : index
    %3 = vector.load %arg2[%c0, %c0_1] : memref<16x128xf32, #tpu.memory_space<vmem>>, vector<16x128xf32>
    %c0_2 = arith.constant 0 : index
    %c0_3 = arith.constant 0 : index
    %4 = vector.load %arg3[%c0_2, %c0_3] : memref<16x128xf32, #tpu.memory_space<vmem>>, vector<16x128xf32>
    %c0_4 = arith.constant 0 : index
    %c0_5 = arith.constant 0 : index
    %c0_6 = arith.constant 0 : index
    %5 = vector.load %arg4[%c0_4, %c0_5, %c0_6] : memref<1x8x128xf32, #tpu.memory_space<vmem>>, vector<1x8x128xf32>
    %6 = vector.shape_cast %3 : vector<16x128xf32> to vector<1x2x8x128xf32>
    %cst = arith.constant dense<0.000000e+00> : vector<1x8x128xf32>
    %7 = vector.multi_reduction <add>, %6, %cst [1] : vector<1x2x8x128xf32> to vector<1x8x128xf32>
    %8 = arith.addf %5, %7 : vector<1x8x128xf32>
    %c0_7 = arith.constant 0 : index
    %c0_8 = arith.constant 0 : index
    %c0_9 = arith.constant 0 : index
    %9 = vector.load %arg4[%c0_7, %c0_8, %c0_9] : memref<1x8x128xf32, #tpu.memory_space<vmem>>, vector<1x8x128xf32>
    tpu.vector_store %arg4[%c0_7, %c0_8, %c0_9], %8 {strides = array<i32>} : memref<1x8x128xf32, #tpu.memory_space<vmem>>, vector<1x8x128xf32>,
    %c0_10 = arith.constant 0 : index
    %c0_11 = arith.constant 0 : index
    %c0_12 = arith.constant 0 : index
    %10 = vector.load %arg5[%c0_10, %c0_11, %c0_12] : memref<1x8x128xf32, #tpu.memory_space<vmem>>, vector<1x8x128xf32>
    %11 = vector.shape_cast %4 : vector<16x128xf32> to vector<1x2x8x128xf32>
    %cst_13 = arith.constant dense<0.000000e+00> : vector<1x8x128xf32>
    %12 = vector.multi_reduction <add>, %11, %cst_13 [1] : vector<1x2x8x128xf32> to vector<1x8x128xf32>
    %13 = arith.addf %10, %12 : vector<1x8x128xf32>
    %c0_14 = arith.constant 0 : index
    %c0_15 = arith.constant 0 : index
    %c0_16 = arith.constant 0 : index
    %14 = vector.load %arg5[%c0_14, %c0_15, %c0_16] : memref<1x8x128xf32, #tpu.memory_space<vmem>>, vector<1x8x128xf32>
    tpu.vector_store %arg5[%c0_14, %c0_15, %c0_16], %13 {strides = array<i32>} : memref<1x8x128xf32, #tpu.memory_space<vmem>>, vector<1x8x128xf32>,
    return
  }
  func.func @transform_0(%arg0: i32, %arg1: i32) -> (i32, i32) {
    %c1_i32 = arith.constant 1 : i32
    %0 = arith.muli %arg0, %c1_i32 : i32
    %1 = arith.addi %0, %arg1 : i32
    %c0_i32 = arith.constant 0 : i32
    %c0_i32_0 = arith.constant 0 : i32
    return %1, %c0_i32 : i32, i32
  }
  func.func @transform_1(%arg0: i32, %arg1: i32) -> (i32, i32) {
    %c1_i32 = arith.constant 1 : i32
    %0 = arith.muli %arg0, %c1_i32 : i32
    %1 = arith.addi %0, %arg1 : i32
    %c0_i32 = arith.constant 0 : i32
    %c0_i32_0 = arith.constant 0 : i32
    return %1, %c0_i32 : i32, i32
  }
  func.func @transform_2(%arg0: i32, %arg1: i32) -> (i32, i32, i32) {
    %c0_i32 = arith.constant 0 : i32
    %c0_i32_0 = arith.constant 0 : i32
    %c0_i32_1 = arith.constant 0 : i32
    return %arg0, %c0_i32, %c0_i32_0 : i32, i32, i32
  }
  func.func @transform_3(%arg0: i32, %arg1: i32) -> (i32, i32, i32) {
    %c0_i32 = arith.constant 0 : i32
    %c0_i32_0 = arith.constant 0 : i32
    %c0_i32_1 = arith.constant 0 : i32
    return %arg0, %c0_i32, %c0_i32_0 : i32, i32, i32
  }
}

</mosaic_0001>

<llo_original>
// kernel: tpu_custom_call.1
$region0: #{tpu_custom_call.1}
  #allocation0 [shape = 'u32[]', space=smem, size = 0x4, offset = 0x4, fixed_abs, tag = 'smem constant byte address 0x4 - core index']
  #allocation1 [shape = 'u32[144,128]{1,0:T(1,128)}', space=vmem, size = 0x12000, scoped, tag = 'internal scratch']
  %s0 = inlined_call_operand.hbm [shape: f32[16,128], index: 0, kind: input, shape index: {}]
  %s1 = inlined_call_operand.hbm [shape: f32[16,128], index: 1, kind: input, shape index: {}]
  %s2 = inlined_call_operand.hbm [shape: f32[1,8,128], index: 2, kind: output, shape index: {0}]
  %s3 = inlined_call_operand.hbm [shape: f32[1,8,128], index: 3, kind: output, shape index: {1}]
  %4 = xla_tuple %s2, %s3
  %s5 = sld [smem:[#allocation0]]
  $region38: #{tpu_custom_call.1} parent=0
    _
  %s7 = ssub.s32 1, %s5
  %s8 = scalar_select 0, %s7, %s5
  $region1: #{tpu_custom_call.1} parent=0
    #allocation2 [shape = 'u8[8192]{0}', space=vmem, size = 0x2000, scoped, tag = 'input window, operand 0, single buffered']
    #allocation3 [shape = 's32[1]{0}', space=sflag, size = 0x4, scoped, tag = 'scoped memory for tpu_custom_call.1']
    #allocation4 [shape = 's32[1]{0}', space=sflag, size = 0x4, scoped, tag = 'scoped memory for tpu_custom_call.1']
    #allocation5 [shape = 'u8[8192]{0}', space=vmem, size = 0x2000, scoped, tag = 'input window, operand 1, single buffered']
    #allocation6 [shape = 's32[1]{0}', space=sflag, size = 0x4, scoped, tag = 'scoped memory for tpu_custom_call.1']
    #allocation7 [shape = 'u8[4096]{0}', space=vmem, size = 0x1000, scoped, tag = 'output window, operand 0, single buffered']
    #allocation8 [shape = 'u8[4096]{0}', space=vmem, size = 0x1000, scoped, tag = 'output window, operand 1, single buffered']
    #allocation9 [shape = 's32[1]{0}', space=sflag, size = 0x4, scoped, tag = 'scoped memory for tpu_custom_call.1']
    %9 = vsyncpa [#allocation3], 0
    %10 = vsyncpa [#allocation6], 0
    %11 = vsyncpa [#allocation4], 0
    %12 = vsyncpa [#allocation9], 0
    // Predicated region
    $region2: #{tpu_custom_call.1} parent=1 // pred_check
      _
    $region3: #{tpu_custom_call.1} parent=1 // pred_check_branch
      %14 = sbr.rel (0) target = $region5
    $region4: #{tpu_custom_call.1} parent=1 // pred_region
      %s15 = sadd.s32 0, 0
      %s16 = smul.u32 2, %s15
      %s18 = ssub.s32 256, 256
      %19 = vsyncadd [#allocation3], %s18
      %s20 = smul.addr %s16, 128
      %s21 = scalar_lea.hbm %s0, %s20
      %s22 = sshll.u32 [#allocation2], 4
      %s23 = int_to_ptr.vmem [resolvable:$true] %s22
      %28 = dma.hbm_to_vmem [thread:$0]  %s21, 256, %s23, [#allocation3], 128, 128, 8
    $region5: #{tpu_custom_call.1} parent=1 // pred_fallthru
      _
    // Predicated region
    $region6: #{tpu_custom_call.1} parent=1 // pred_check
      _
    $region7: #{tpu_custom_call.1} parent=1 // pred_check_branch
      %30 = sbr.rel (0) target = $region9
    $region8: #{tpu_custom_call.1} parent=1 // pred_region
      %s31 = sadd.s32 0, 0
      %s32 = smul.u32 2, %s31
      %s34 = ssub.s32 256, 256
      %35 = vsyncadd [#allocation6], %s34
      %s36 = smul.addr %s32, 128
      %s37 = scalar_lea.hbm %s1, %s36
      %s38 = sshll.u32 [#allocation5], 4
      %s39 = int_to_ptr.vmem [resolvable:$true] %s38
      %44 = dma.hbm_to_vmem [thread:$0]  %s37, 256, %s39, [#allocation6], 128, 128, 8
    $region9: #{tpu_custom_call.1} parent=1 // pred_fallthru
      _
    // Predicated region
    $region10: #{tpu_custom_call.1} parent=1 // pred_check
      _
    $region11: #{tpu_custom_call.1} parent=1 // pred_check_branch
      %46 = sbr.rel (0) target = $region13
    $region12: #{tpu_custom_call.1} parent=1 // pred_region
      %47 = dma.done [#allocation3], 256
    $region13: #{tpu_custom_call.1} parent=1 // pred_fallthru
      _
    // Predicated region
    $region14: #{tpu_custom_call.1} parent=1 // pred_check
      _
    $region15: #{tpu_custom_call.1} parent=1 // pred_check_branch
      %49 = sbr.rel (0) target = $region17
    $region16: #{tpu_custom_call.1} parent=1 // pred_region
      %50 = dma.done [#allocation6], 256
    $region17: #{tpu_custom_call.1} parent=1 // pred_fallthru
      _
    %s51 = sadd.s32 0, 0
    %s52 = smul.u32 2, %s51
    %s53 = sadd.s32 0, 0
    %s54 = smul.u32 2, %s53
    %p55 = scmp.eq.s32.totalorder 0, 0
    // Predicated region
    $region18: #{tpu_custom_call.1} parent=1 // pred_check
      %p56 = pneg %p55
    $region19: #{tpu_custom_call.1} parent=1 // pred_check_branch
      %58 = sbr.rel (%p56) target = $region21
    $region20: #{tpu_custom_call.1} parent=1 // pred_region
      %59 = vst [vmem:[#allocation7] sm:$0xff] 0.0
      %60 = vst [vmem:[#allocation8] sm:$0xff] 0.0
    $region21: #{tpu_custom_call.1} parent=1 // pred_fallthru
      _
    %v61 = vld [vmem:[#allocation2] sm:$0xff]
    %v62 = vld [vmem:[#allocation2 + $0x8] sm:$0xff]
    %v63 = vld [vmem:[#allocation5] sm:$0xff]
    %v64 = vld [vmem:[#allocation5 + $0x8] sm:$0xff]
    %v65 = vld [vmem:[#allocation7] sm:$0xff]
    %v66 = vadd.f32 %v61, %v62
    %v67 = vadd.f32 %v65, %v66
    %68 = vst [vmem:[#allocation7] sm:$0xff] %v67
    %v69 = vld [vmem:[#allocation8] sm:$0xff]
    %v70 = vadd.f32 %v63, %v64
    %v71 = vadd.f32 %v69, %v70
    %72 = vst [vmem:[#allocation8] sm:$0xff] %v71
    // Predicated region
    $region22: #{tpu_custom_call.1} parent=1 // pred_check
      _
    $region23: #{tpu_custom_call.1} parent=1 // pred_check_branch
      %74 = sbr.rel (0) target = $region25
    $region24: #{tpu_custom_call.1} parent=1 // pred_region
      %s76 = ssub.s32 128, 128
      %77 = vsyncadd [#allocation4], %s76
      %s79 = sshll.u32 [#allocation7], 4
      %s80 = int_to_ptr.vmem [resolvable:$true] %s79
      %82 = dma.vmem_to_hbm [thread:$0]  %s80, 128, %s2, [#allocation4]
    $region25: #{tpu_custom_call.1} parent=1 // pred_fallthru
      _
    // Predicated region
    $region26: #{tpu_custom_call.1} parent=1 // pred_check
      _
    $region27: #{tpu_custom_call.1} parent=1 // pred_check_branch
      %84 = sbr.rel (0) target = $region29
    $region28: #{tpu_custom_call.1} parent=1 // pred_region
      %s86 = ssub.s32 128, 128
      %87 = vsyncadd [#allocation9], %s86
      %s89 = sshll.u32 [#allocation8], 4
      %s90 = int_to_ptr.vmem [resolvable:$true] %s89
      %92 = dma.vmem_to_hbm [thread:$0]  %s90, 128, %s3, [#allocation9]
    $region29: #{tpu_custom_call.1} parent=1 // pred_fallthru
      _
    // Predicated region
    $region30: #{tpu_custom_call.1} parent=1 // pred_check
      _
    $region31: #{tpu_custom_call.1} parent=1 // pred_check_branch
      %94 = sbr.rel (0) target = $region33
    $region32: #{tpu_custom_call.1} parent=1 // pred_region
      %95 = dma.done [#allocation4], 128
    $region33: #{tpu_custom_call.1} parent=1 // pred_fallthru
      _
    // Predicated region
    $region34: #{tpu_custom_call.1} parent=1 // pred_check
      _
    $region35: #{tpu_custom_call.1} parent=1 // pred_check_branch
      %97 = sbr.rel (0) target = $region37
    $region36: #{tpu_custom_call.1} parent=1 // pred_region
      %98 = dma.done [#allocation9], 128
    $region37: #{tpu_custom_call.1} parent=1 // pred_fallthru
      _
    %99 = vsyncpa [#allocation3], 1
    %100 = vsyncpa [#allocation6], 1
    %101 = vsyncpa [#allocation4], 1
    %102 = vsyncpa [#allocation9], 1

</llo_original>
